<compile_context>
chip_gen: v5e
topology: v5e:2x2
jax: 0.10.0
libtpu: 0.0.40
codegen_flags: <defaults>
</compile_context>

<pallas_src>
import jax
import jax.numpy as jnp
from jax.experimental import pallas as pl
from jax.experimental.pallas import tpu as pltpu

_LANE = 128
_MIN_STEPS = 8            # target grid steps so DMA/compute overlap stays primed
_VMEM_BUDGET = 6 << 20    # conservative: fits v5e's 16 MiB scoped default


def _round_up(x, m):
    return (x + m - 1) // m * m


def _merge_kernel(x_ref, w_ref, b_ref, o_ref):
    # x_ref: [Bblk, Cin, TS] (bf16)   w_ref: [Cout, Cin] (bf16)
    # b_ref: [Cout, 1] (f32)          o_ref: [Bblk, Cout, TS] (out dtype)
    w = w_ref[...]
    b = b_ref[...]
    # Bblk is a small static block dim: a plain Python loop fully unrolls and
    # keeps every per-batch matmul a 2-D MXU call (no batched-dot transposes).
    for i in range(x_ref.shape[0]):
        acc = jnp.dot(w, x_ref[i], preferred_element_type=jnp.float32)
        o_ref[i] = (acc + b).astype(o_ref.dtype)


def _pick_tiling(B, HWp, in_col_bytes, out_col_bytes,
                 vmem_budget=_VMEM_BUDGET, min_steps=_MIN_STEPS):
    """Choose (Bblk, TS) for the (batch, spatial) grid.

    `in_col_bytes` / `out_col_bytes` are sublane-padded bytes per lane column
    per batch element.  The budget covers double-buffered input + output blocks.
    """
    per_col = 2 * (in_col_bytes + out_col_bytes)        # double-buffered
    n_lane = HWp // _LANE
    max_steps = B * n_lane                               # finest legal split

    # Spatial tile: largest lane-multiple within budget (Bblk=1) ...
    ts = min(HWp, max(_LANE, (vmem_budget // per_col) // _LANE * _LANE))
    # ... then shrink so the grid has >= min_steps steps when possible.
    if max_steps >= min_steps:
        want_ns = pl.cdiv(min_steps, B)
        ts_cap = max(_LANE, (HWp // want_ns) // _LANE * _LANE)
        ts = min(ts, ts_cap)
    n_s = pl.cdiv(HWp, ts)                               # masked edge block is fine

    # Batch block: pack batch elements per step (bigger DMAs, fewer steps)
    # while staying in budget and keeping >= min_steps total steps.
    max_bblk = max(1, vmem_budget // (per_col * ts))
    bblk = min(B, max_bblk)
    if max_steps >= min_steps:
        bblk = min(bblk, max(1, (B * n_s) // min_steps))
    while B % bblk:                                      # full batch blocks only
        bblk -= 1
    return bblk, ts


def merge_forward(x_nchw, weight, bias, *, compute_dtype=jnp.bfloat16):
    """1x1 conv (Merge) forward.

    Args:
      x_nchw: [B, Cin, H, W]
      weight: [Cout, Cin] (or PyTorch conv weight [Cout, Cin, 1, 1])
      bias:   [Cout]
    Returns:
      [B, Cout, H, W] in x's dtype.
    """
    B, Cin, H, W = x_nchw.shape
    if weight.ndim == 4:
        weight = weight.reshape(weight.shape[0], weight.shape[1])
    Cout = weight.shape[0]
    HW = H * W
    HWp = _round_up(HW, _LANE)
    out_dtype = x_nchw.dtype

    # NCHW is already [B, Cin, H*W]-contiguous: reshape only; pad lanes to 128.
    x_mat = x_nchw.reshape(B, Cin, HW)
    if HWp != HW:
        x_mat = jnp.pad(x_mat, ((0, 0), (0, 0), (0, HWp - HW)))
    x_mat = x_mat.astype(compute_dtype)
    w_mat = weight.astype(compute_dtype)
    b_col = bias.astype(jnp.float32).reshape(Cout, 1)    # broadcast over lanes

    # Sublane-padded per-lane-column bytes (honest VMEM accounting).
    in_item = jnp.dtype(compute_dtype).itemsize
    out_item = jnp.dtype(out_dtype).itemsize
    in_col_bytes = _round_up(Cin, 32 // in_item) * in_item
    out_col_bytes = _round_up(Cout, 32 // out_item) * out_item

    bblk, ts = _pick_tiling(B, HWp, in_col_bytes, out_col_bytes)
    n_b = B // bblk
    n_s = pl.cdiv(HWp, ts)

    # Explicit VMEM limit derived from the chosen tiles (2x slack + headroom).
    in_block = 2 * bblk * in_col_bytes * ts
    out_block = 2 * bblk * out_col_bytes * ts
    vmem_limit = int(min(max(2 * (in_block + out_block) + (2 << 20), 16 << 20),
                         60 << 20))

    cost = pl.CostEstimate(
        flops=2 * B * Cout * Cin * HW,
        bytes_accessed=(B * Cin * HWp * in_item + B * Cout * HWp * out_item
                        + Cout * Cin * in_item + Cout * 4),
        transcendentals=0,
    )

    out_mat = pl.pallas_call(
        _merge_kernel,
        out_shape=jax.ShapeDtypeStruct((B, Cout, HWp), out_dtype),
        grid=(n_b, n_s),
        in_specs=[
            pl.BlockSpec((bblk, Cin, ts), lambda b, s: (b, 0, s)),
            pl.BlockSpec((Cout, Cin), lambda b, s: (0, 0)),
            pl.BlockSpec((Cout, 1), lambda b, s: (0, 0)),
        ],
        out_specs=pl.BlockSpec((bblk, Cout, ts), lambda b, s: (b, 0, s)),
        compiler_params=pltpu.CompilerParams(
            dimension_semantics=("parallel", "parallel"),
            vmem_limit_bytes=vmem_limit,
        ),
        cost_estimate=cost,
    )(x_mat, w_mat, b_col)

    if HWp != HW:
        out_mat = out_mat[:, :, :HW]
    return out_mat.reshape(B, Cout, H, W)


if __name__ == "__main__":
    # Small shapes consistent with the module: NCHW input, 1x1 conv x_dim->y_dim.
    B, Cin, Cout, H, W = 2, 4, 8, 16, 16

    key = jax.random.PRNGKey(0)
    kx, kw, kb = jax.random.split(key, 3)

    x = jax.random.normal(kx, (B, Cin, H, W), dtype=jnp.float32)
    weight = jax.random.normal(kw, (Cout, Cin), dtype=jnp.float32) * 0.1
    bias = jax.random.normal(kb, (Cout,), dtype=jnp.float32) * 0.1

    out = merge_forward(x, weight, bias)
    jax.block_until_ready(out)
    assert out.shape == (B, Cout, H, W)

    # Reference uses the same bf16 quantization of the MXU inputs with f32
    # accumulation + f32 bias (matches the kernel's compute path).
    xq = x.astype(jnp.bfloat16).astype(jnp.float32)
    wq = weight.astype(jnp.bfloat16).astype(jnp.float32)
    ref = jnp.einsum("bchw,oc->bohw", xq, wq) + bias[None, :, None, None]
    assert jnp.allclose(out, ref, atol=1e-4, rtol=1e-4)

    # Non-128-aligned spatial map (7x7) exercises the lane-padding / slice path.
    H2 = W2 = 7
    x2 = jax.random.normal(kx, (B, Cin, H2, W2), dtype=jnp.float32)
    out2 = merge_forward(x2, weight, bias)
    jax.block_until_ready(out2)
    x2q = x2.astype(jnp.bfloat16).astype(jnp.float32)
    ref2 = jnp.einsum("bchw,oc->bohw", x2q, wq) + bias[None, :, None, None]
    assert out2.shape == (B, Cout, H2, W2)
    assert jnp.allclose(out2, ref2, atol=1e-4, rtol=1e-4)

    print("KERNEL_OK")
</pallas_src>

<mosaic_0001>
module attributes {stable_mosaic.version = 11 : i64} {
  func.func @_merge_kernel(%arg0: i32, %arg1: i32, %arg2: memref<2x4x256xbf16, #tpu.memory_space<vmem>>, %arg3: memref<8x4xbf16, #tpu.memory_space<vmem>>, %arg4: memref<8x1xf32, #tpu.memory_space<vmem>>, %arg5: memref<2x8x256xf32, #tpu.memory_space<vmem>>) attributes {dimension_semantics = [#tpu.dimension_semantics<parallel>, #tpu.dimension_semantics<parallel>], iteration_bounds = array<i64: 1, 1>, scalar_prefetch = 0 : i64, scratch_operands = 0 : i64, tpu.core_type = #tpu.core_type<tc>, window_params = [{transform_indices = @transform_0, window_bounds = array<i64: 2, 4, 256>}, {pipeline_mode = #tpu.pipeline_mode<synchronous>, transform_indices = @transform_1, window_bounds = array<i64: 8, 4>}, {pipeline_mode = #tpu.pipeline_mode<synchronous>, transform_indices = @transform_2, window_bounds = array<i64: 8, 1>}, {transform_indices = @transform_3, window_bounds = array<i64: 2, 8, 256>}]} {
    %c0 = arith.constant 0 : index
    %c0_0 = arith.constant 0 : index
    %0 = vector.load %arg3[%c0, %c0_0] : memref<8x4xbf16, #tpu.memory_space<vmem>>, vector<8x4xbf16>
    %c0_1 = arith.constant 0 : index
    %c0_2 = arith.constant 0 : index
    %1 = vector.load %arg4[%c0_1, %c0_2] : memref<8x1xf32, #tpu.memory_space<vmem>>, vector<8x1xf32>
    %c0_3 = arith.constant 0 : index
    %c0_4 = arith.constant 0 : index
    %c0_5 = arith.constant 0 : index
    %2 = vector.load %arg2[%c0_3, %c0_4, %c0_5] : memref<2x4x256xbf16, #tpu.memory_space<vmem>>, vector<1x4x256xbf16>
    %3 = vector.shape_cast %2 : vector<1x4x256xbf16> to vector<4x256xbf16>
    %cst = arith.constant dense<0.000000e+00> : vector<8x256xf32>
    %4 = tpu.matmul %0, %3, %cst {dimension_numbers = #tpu.dot_dimension_numbers<[1], [0], [0], [1], [0, 0, 1, 1], [], []>} : vector<8x4xbf16>, vector<4x256xbf16>, vector<8x256xf32> -> vector<8x256xf32>
    %5 = vector.broadcast %1 : vector<8x1xf32> to vector<8x256xf32>
    %6 = arith.addf %4, %5 : vector<8x256xf32>
    %c0_6 = arith.constant 0 : index
    %c0_7 = arith.constant 0 : index
    %c0_8 = arith.constant 0 : index
    %7 = vector.load %arg5[%c0_6, %c0_7, %c0_8] : memref<2x8x256xf32, #tpu.memory_space<vmem>>, vector<1x8x256xf32>
    %8 = vector.shape_cast %7 : vector<1x8x256xf32> to vector<8x256xf32>
    %9 = vector.shape_cast %6 : vector<8x256xf32> to vector<1x8x256xf32>
    tpu.vector_store %arg5[%c0_6, %c0_7, %c0_8], %9 {strides = array<i32>} : memref<2x8x256xf32, #tpu.memory_space<vmem>>, vector<1x8x256xf32>,
    %c1 = arith.constant 1 : index
    %c0_9 = arith.constant 0 : index
    %c0_10 = arith.constant 0 : index
    %10 = vector.load %arg2[%c1, %c0_9, %c0_10] : memref<2x4x256xbf16, #tpu.memory_space<vmem>>, vector<1x4x256xbf16>
    %11 = vector.shape_cast %10 : vector<1x4x256xbf16> to vector<4x256xbf16>
    %cst_11 = arith.constant dense<0.000000e+00> : vector<8x256xf32>
    %12 = tpu.matmul %0, %11, %cst_11 {dimension_numbers = #tpu.dot_dimension_numbers<[1], [0], [0], [1], [0, 0, 1, 1], [], []>} : vector<8x4xbf16>, vector<4x256xbf16>, vector<8x256xf32> -> vector<8x256xf32>
    %13 = vector.broadcast %1 : vector<8x1xf32> to vector<8x256xf32>
    %14 = arith.addf %12, %13 : vector<8x256xf32>
    %c1_12 = arith.constant 1 : index
    %c0_13 = arith.constant 0 : index
    %c0_14 = arith.constant 0 : index
    %15 = vector.load %arg5[%c1_12, %c0_13, %c0_14] : memref<2x8x256xf32, #tpu.memory_space<vmem>>, vector<1x8x256xf32>
    %16 = vector.shape_cast %15 : vector<1x8x256xf32> to vector<8x256xf32>
    %17 = vector.shape_cast %14 : vector<8x256xf32> to vector<1x8x256xf32>
    tpu.vector_store %arg5[%c1_12, %c0_13, %c0_14], %17 {strides = array<i32>} : memref<2x8x256xf32, #tpu.memory_space<vmem>>, vector<1x8x256xf32>,
    return
  }
  func.func @transform_0(%arg0: i32, %arg1: i32) -> (i32, i32, i32) {
    %c0_i32 = arith.constant 0 : i32
    %c0_i32_0 = arith.constant 0 : i32
    return %arg0, %c0_i32, %arg1 : i32, i32, i32
  }
  func.func @transform_1(%arg0: i32, %arg1: i32) -> (i32, i32) {
    %c0_i32 = arith.constant 0 : i32
    %c0_i32_0 = arith.constant 0 : i32
    %c0_i32_1 = arith.constant 0 : i32
    return %c0_i32, %c0_i32_0 : i32, i32
  }
  func.func @transform_2(%arg0: i32, %arg1: i32) -> (i32, i32) {
    %c0_i32 = arith.constant 0 : i32
    %c0_i32_0 = arith.constant 0 : i32
    %c0_i32_1 = arith.constant 0 : i32
    return %c0_i32, %c0_i32_0 : i32, i32
  }
  func.func @transform_3(%arg0: i32, %arg1: i32) -> (i32, i32, i32) {
    %c0_i32 = arith.constant 0 : i32
    %c0_i32_0 = arith.constant 0 : i32
    return %arg0, %c0_i32, %arg1 : i32, i32, i32
  }
}

</mosaic_0001>

<llo_original>
// kernel: tpu_custom_call.1
$region0: #{tpu_custom_call.1}
  #allocation0 [shape = 'u32[]', space=smem, size = 0x4, offset = 0x4, fixed_abs, tag = 'smem constant byte address 0x4 - core index']
  #allocation1 [shape = 'u32[72,128]{1,0:T(1,128)}', space=vmem, size = 0x9000, scoped, tag = 'internal scratch']
  %s0 = inlined_call_operand.vmem [shape: bf16[2,4,256], index: 0, kind: input, shape index: {}]
  %s1 = inlined_call_operand.vmem [shape: bf16[8,4], index: 1, kind: input, shape index: {}]
  %s2 = inlined_call_operand.vmem [shape: f32[8,1], index: 2, kind: input, shape index: {}]
  %s3 = inlined_call_operand.hbm [shape: f32[2,8,256], index: 3, kind: output, shape index: {}]
  %s4 = sld [smem:[#allocation0]]
  $region22: #{tpu_custom_call.1} parent=0
    _
  %s6 = ssub.s32 1, %s4
  %s7 = scalar_select 0, %s6, %s4
  $region1: #{tpu_custom_call.1} parent=0
    #allocation2 [shape = 'u8[16384]{0}', space=vmem, size = 0x4000, scoped, tag = 'output window, operand 0, single buffered']
    #allocation3 [shape = 's32[1]{0}', space=sflag, size = 0x4, scoped, tag = 'scoped memory for tpu_custom_call.1']
    %8 = vsyncpa [#allocation3], 0
    // Predicated region
    $region2: #{tpu_custom_call.1} parent=1 // pred_check
      _
    $region3: #{tpu_custom_call.1} parent=1 // pred_check_branch
      %10 = sbr.rel (0) target = $region5
    $region4: #{tpu_custom_call.1} parent=1 // pred_region
      _
    $region5: #{tpu_custom_call.1} parent=1 // pred_fallthru
      _
    // Predicated region
    $region6: #{tpu_custom_call.1} parent=1 // pred_check
      _
    $region7: #{tpu_custom_call.1} parent=1 // pred_check_branch
      %12 = sbr.rel (0) target = $region9
    $region8: #{tpu_custom_call.1} parent=1 // pred_region
      _
    $region9: #{tpu_custom_call.1} parent=1 // pred_fallthru
      _
    // Predicated region
    $region10: #{tpu_custom_call.1} parent=1 // pred_check
      _
    $region11: #{tpu_custom_call.1} parent=1 // pred_check_branch
      %14 = sbr.rel (0) target = $region13
    $region12: #{tpu_custom_call.1} parent=1 // pred_region
      _
    $region13: #{tpu_custom_call.1} parent=1 // pred_fallthru
      _
    %v16 = vld [vmem:[%s1] sm:$0xf]
    %v17 = vld [vmem:[%s2] sm:$0xff]
    %v18 = vld [vmem:[%s0] sm:$0xf]
    %20 = vset.pattern.permute.xlu0 0
    %21 = vperm.xlu0 %20, %v17
    %v22 = vpop.permute.xlu0 %21
    %25 = vst [vmem:[#allocation1] ss:$4 sm:$0xff] %v18
    %v26 = vld.sshfl [vmem:[#allocation1] sm:$0xff pattern:$0x73625140]
    %v27 = vld.sshfl [vmem:[#allocation1 + $0x8] sm:$0xff pattern:$0x73625140]
    %vm28 = vcmask 31744
    %v30 = vsel %vm28, %v16, 0
    %vm32 = vcmask 1041408
    %v33 = vsel %vm32, %v26, 0
    %v35 = vsel %vm32, %v27, 0
    %37 = vmatpush.bf16.msra.mxu0 0
    %38 = vmatpush.bf16.msra.mxu0 0
    %39 = vmatpush.bf16.msra.mxu0 0
    %40 = vmatpush.bf16.msra.mxu0 0
    %41 = vmatpush.bf16.msra.mxu0 0
    %42 = vmatpush.bf16.msra.mxu0 0
    %43 = vmatpush.bf16.msra.mxu0 0
    %44 = vmatpush.bf16.msra.mxu0 %v33
    %45 = vmatmul.bf16.gmra.mxu0 %v30
    %v46 = vpop.f32.mrf.mxu0
    %v47 = vadd.f32 %v22, %v46
    %v48 = vpop.f32.mrf.mxu0
    %49 = vdwg.mxu0
    %50 = vmatpush.bf16.msra.mxu0 0
    %51 = vmatpush.bf16.msra.mxu0 0
    %52 = vmatpush.bf16.msra.mxu0 0
    %53 = vmatpush.bf16.msra.mxu0 0
    %54 = vmatpush.bf16.msra.mxu0 0
    %55 = vmatpush.bf16.msra.mxu0 0
    %56 = vmatpush.bf16.msra.mxu0 0
    %57 = vmatpush.bf16.msra.mxu0 %v35
    %58 = vmatmul.bf16.gmra.mxu0 %v30
    %v59 = vpop.f32.mrf.mxu0
    %v60 = vadd.f32 %v22, %v59
    %v61 = vpop.f32.mrf.mxu0
    %62 = vdwg.mxu0
    %63 = vst [vmem:[#allocation2] sm:$0xff] %v47
    %64 = vst [vmem:[#allocation2 + $0x8] sm:$0xff] %v60
    %s65 = scalar_lea.vmem %s0, 4
    %v66 = vld [vmem:[%s65] sm:$0xf]
    %68 = vst [vmem:[#allocation1] ss:$4 sm:$0xff] %v66
    %v69 = vld.sshfl [vmem:[#allocation1] sm:$0xff pattern:$0x73625140]
    %v70 = vld.sshfl [vmem:[#allocation1 + $0x8] sm:$0xff pattern:$0x73625140]
    %v71 = vsel %vm32, %v69, 0
    %v73 = vsel %vm32, %v70, 0
    %75 = vmatpush.bf16.msra.mxu0 0
    %76 = vmatpush.bf16.msra.mxu0 0
    %77 = vmatpush.bf16.msra.mxu0 0
    %78 = vmatpush.bf16.msra.mxu0 0
    %79 = vmatpush.bf16.msra.mxu0 0
    %80 = vmatpush.bf16.msra.mxu0 0
    %81 = vmatpush.bf16.msra.mxu0 0
    %82 = vmatpush.bf16.msra.mxu0 %v71
    %83 = vmatmul.bf16.gmra.mxu0 %v30
    %v84 = vpop.f32.mrf.mxu0
    %v85 = vadd.f32 %v22, %v84
    %v86 = vpop.f32.mrf.mxu0
    %87 = vdwg.mxu0
    %88 = vmatpush.bf16.msra.mxu0 0
    %89 = vmatpush.bf16.msra.mxu0 0
    %90 = vmatpush.bf16.msra.mxu0 0
    %91 = vmatpush.bf16.msra.mxu0 0
    %92 = vmatpush.bf16.msra.mxu0 0
    %93 = vmatpush.bf16.msra.mxu0 0
    %94 = vmatpush.bf16.msra.mxu0 0
    %95 = vmatpush.bf16.msra.mxu0 %v73
    %96 = vmatmul.bf16.gmra.mxu0 %v30
    %v97 = vpop.f32.mrf.mxu0
    %v98 = vadd.f32 %v22, %v97
    %v99 = vpop.f32.mrf.mxu0
    %100 = vdwg.mxu0
    %s101 = scalar_lea.vmem [#allocation2], 16
    %102 = vst [vmem:[%s101] sm:$0xff] %v85
    %103 = vst [vmem:[%s101 + $0x8] sm:$0xff] %v98
    // Predicated region
    $region14: #{tpu_custom_call.1} parent=1 // pred_check
      _
    $region15: #{tpu_custom_call.1} parent=1 // pred_check_branch
      %105 = sbr.rel (0) target = $region17
    $region16: #{tpu_custom_call.1} parent=1 // pred_region
      %107 = vsyncadd [#allocation3], 0
      %s108 = sshll.u32 [#allocation2], 4
      %s109 = int_to_ptr.vmem [resolvable:$true] %s108
      %s110 = sshll.u32 %s3, 4
      %s111 = int_to_ptr.hbm [resolvable:$true] %s110
      %116 = dma.vmem_to_hbm [thread:$0]  %s109, 512, %s111, [#allocation3], 256, 256, 16
    $region17: #{tpu_custom_call.1} parent=1 // pred_fallthru
      _
    // Predicated region
    $region18: #{tpu_custom_call.1} parent=1 // pred_check
      _
    $region19: #{tpu_custom_call.1} parent=1 // pred_check_branch
      %118 = sbr.rel (0) target = $region21
    $region20: #{tpu_custom_call.1} parent=1 // pred_region
      %120 = dma.done [#allocation3], 512
    $region21: #{tpu_custom_call.1} parent=1 // pred_fallthru
      _
    %121 = vsyncpa [#allocation3], 1

</llo_original>
